<compile_context>
chip_gen: v7x
topology: tpu7x:2x2x1
jax: 0.10.0
libtpu: 0.0.40
codegen_flags: <defaults>
</compile_context>

<pallas_src>
import jax
import jax.numpy as jnp
from jax import lax
from jax.experimental import pallas as pl
from jax.experimental.pallas import tpu as pltpu

LANE = 128


def _baseline_head_kernel(ev_ref, tp_ref, pa_ref, pb_ref, b1_ref,
                          w2_ref, b2_ref, o_ref):
    # ev_ref / tp_ref : [Bb, 1]    int32  (token indices for this batch block)
    # pa_ref / pb_ref : [N, H]     f32    (embedding pre-projected by W1a / W1b)
    # b1_ref          : [1, H]     f32
    # w2_ref          : [H, 128]   f32    (zero-padded to a lane-dense width)
    # b2_ref          : [1, 128]   f32    (zero-padded)
    # o_ref           : [Bb, 128]  f32
    n_tok = pa_ref.shape[0]
    bb = ev_ref.shape[0]

    # Exact row gather of P_a / P_b as a one-hot matmul (K = N_TOKENS, tiny).
    iota = lax.broadcasted_iota(jnp.int32, (bb, n_tok), 1)
    onehot_e = (ev_ref[...] == iota).astype(jnp.float32)      # [Bb, N]
    onehot_t = (tp_ref[...] == iota).astype(jnp.float32)      # [Bb, N]

    # h = relu(P_a[ev] + P_b[tp] + b1)
    h = jnp.dot(onehot_e, pa_ref[...], preferred_element_type=jnp.float32)
    h = h + jnp.dot(onehot_t, pb_ref[...], preferred_element_type=jnp.float32)
    h = h + b1_ref[...]
    h = jnp.maximum(h, 0.0)                                   # ReLU

    # logits (lane-padded to 128 so the store is an unmasked vst).
    out = jnp.dot(h, w2_ref[...], preferred_element_type=jnp.float32)
    o_ref[...] = (out + b2_ref[...]).astype(o_ref.dtype)


def prepare_params(params):
    """One-time parameter preprocessing (hoisted out of the per-call path).

    Call once and reuse (e.g. close over the result under jit).
    `params["w1"]` is expected in [2E, H] (in, out) layout — transposed vs.
    PyTorch's nn.Linear weight; transpose when importing a torch checkpoint.
    """
    w1 = jnp.asarray(params["w1"], jnp.float32)   # [2E, H]
    b1 = jnp.asarray(params["b1"], jnp.float32)   # [H]
    w2 = jnp.asarray(params["w2"], jnp.float32)   # [H, C]
    b2 = jnp.asarray(params["b2"], jnp.float32)   # [C]

    two_e, hidden = w1.shape
    embed = two_e // 2
    out_dim = w2.shape[1]
    n_pad = pl.cdiv(out_dim, LANE) * LANE

    return {
        "w1a": w1[:embed],                                         # [E, H]
        "w1b": w1[embed:],                                         # [E, H]
        "b1": b1.reshape(1, hidden),                               # [1, H]
        "w2_pad": jnp.pad(w2, ((0, 0), (0, n_pad - out_dim))),     # [H, 128]
        "b2_pad": jnp.pad(b2, (0, n_pad - out_dim)).reshape(1, n_pad),
        "out_dim": out_dim,                                        # static int
    }


def _pick_block_b(batch):
    """Batch tile: 128 on v5e (4x128^2 MXU), 256 on v6e/v7x (2x256^2 MXU);
    force >= 2 grid blocks when batch > 16 so v7x's two TensorCores both get
    work on the 'parallel' batch axis."""
    try:
        kind = jax.devices()[0].device_kind.lower()
    except Exception:  # pragma: no cover - defensive only
        kind = ""
    cap = 128 if "v5" in kind else 256
    target = -(-batch // 2) if batch > 16 else batch   # ceil(batch/2) -> >=2 blocks
    block = -(-target // 8) * 8                        # round up to sublane multiple
    return max(8, min(block, cap))


def baseline_forward(narrative_embedding, event_pos, time_pos, prepared):
    """Baseline.forward (dropout p=0 elided). `prepared` = prepare_params(...)."""
    w1a, w1b = prepared["w1a"], prepared["w1b"]
    b1, w2_pad, b2_pad = prepared["b1"], prepared["w2_pad"], prepared["b2_pad"]
    out_dim = prepared["out_dim"]

    n_tok, _ = narrative_embedding.shape
    hidden = w1a.shape[1]
    n_pad = w2_pad.shape[1]
    batch = event_pos.shape[0]

    # Commute the gather with linear_1: project the whole (tiny) narrative once.
    emb = narrative_embedding.astype(jnp.float32)
    p_a = jnp.dot(emb, w1a, precision=lax.Precision.HIGHEST)   # [N, H]
    p_b = jnp.dot(emb, w1b, precision=lax.Precision.HIGHEST)   # [N, H]

    block_b = _pick_block_b(batch)
    padded_b = pl.cdiv(batch, block_b) * block_b
    ev = jnp.pad(event_pos.astype(jnp.int32),
                 (0, padded_b - batch)).reshape(padded_b, 1)
    tp = jnp.pad(time_pos.astype(jnp.int32),
                 (0, padded_b - batch)).reshape(padded_b, 1)

    grid = (padded_b // block_b,)

    flops = 2 * padded_b * (2 * n_tok * hidden + hidden * n_pad)
    bytes_accessed = 4 * (2 * padded_b + 2 * n_tok * hidden + hidden
                          + hidden * n_pad + n_pad + padded_b * n_pad)

    logits_pad = pl.pallas_call(
        _baseline_head_kernel,
        out_shape=jax.ShapeDtypeStruct((padded_b, n_pad), jnp.float32),
        grid_spec=pltpu.PrefetchScalarGridSpec(
            num_scalar_prefetch=0,
            grid=grid,
            in_specs=[
                pl.BlockSpec((block_b, 1), lambda i: (i, 0)),       # event_pos
                pl.BlockSpec((block_b, 1), lambda i: (i, 0)),       # time_pos
                pl.BlockSpec((n_tok, hidden), lambda i: (0, 0)),    # P_a (resident)
                pl.BlockSpec((n_tok, hidden), lambda i: (0, 0)),    # P_b (resident)
                pl.BlockSpec((1, hidden), lambda i: (0, 0)),        # b1
                pl.BlockSpec((hidden, n_pad), lambda i: (0, 0)),    # W2 (lane-padded)
                pl.BlockSpec((1, n_pad), lambda i: (0, 0)),         # b2 (lane-padded)
            ],
            out_specs=pl.BlockSpec((block_b, n_pad), lambda i: (i, 0)),
        ),
        compiler_params=pltpu.CompilerParams(
            dimension_semantics=("parallel",)),
        cost_estimate=pl.CostEstimate(
            flops=flops, transcendentals=0, bytes_accessed=bytes_accessed),
    )(ev, tp, p_a, p_b, b1, w2_pad, b2_pad)

    return logits_pad[:batch, :out_dim]


def init_params(key, bert_embed_size=768, hidden_size=384, num_classes=4):
    """Deterministic init mimicking nn.Linear default (uniform +/- 1/sqrt(fan_in)).
    Weights stored as [in, out] (transposed vs. PyTorch's [out, in])."""
    k1, k2, k3, k4 = jax.random.split(key, 4)
    in1 = bert_embed_size * 2
    bound1 = 1.0 / jnp.sqrt(in1)
    bound2 = 1.0 / jnp.sqrt(hidden_size)
    w1 = jax.random.uniform(k1, (in1, hidden_size), jnp.float32, -bound1, bound1)
    b1 = jax.random.uniform(k2, (hidden_size,), jnp.float32, -bound1, bound1)
    w2 = jax.random.uniform(k3, (hidden_size, num_classes), jnp.float32, -bound2, bound2)
    b2 = jax.random.uniform(k4, (num_classes,), jnp.float32, -bound2, bound2)
    return {"w1": w1, "b1": b1, "w2": w2, "b2": b2}


if __name__ == "__main__":
    key = jax.random.PRNGKey(0)
    kp, kx, ke, kt = jax.random.split(key, 4)

    BERT_EMBED = 768   # module default
    HIDDEN = 384       # module default
    N_TOKENS = 16      # narrative length (small)
    BATCH = 8          # number of (event, time) pairs (small)

    params = init_params(kp, bert_embed_size=BERT_EMBED, hidden_size=HIDDEN)
    prepared = prepare_params(params)   # one-time; reused across calls

    narrative_embedding = jax.random.normal(kx, (N_TOKENS, BERT_EMBED), jnp.float32)
    event_pos = jax.random.randint(ke, (BATCH,), 0, N_TOKENS)
    time_pos = jax.random.randint(kt, (BATCH,), 0, N_TOKENS)

    fwd = jax.jit(lambda emb, ev, tp: baseline_forward(emb, ev, tp, prepared))
    logits = jax.block_until_ready(fwd(narrative_embedding, event_pos, time_pos))

    # Pure-JAX f32 reference of the original module math.
    pair = jnp.concatenate(
        [narrative_embedding[event_pos], narrative_embedding[time_pos]], axis=1)
    ref = jnp.maximum(pair @ params["w1"] + params["b1"], 0.0) @ params["w2"] + params["b2"]
    assert logits.shape == (BATCH, 4)
    assert jnp.allclose(logits, ref, atol=2e-2, rtol=2e-2), (
        float(jnp.max(jnp.abs(logits - ref))))

    print("KERNEL_OK")
</pallas_src>

<mosaic_0001>
module attributes {stable_mosaic.version = 11 : i64} {
  func.func @_baseline_head_kernel(%arg0: i32, %arg1: memref<8x1xi32, #tpu.memory_space<vmem>>, %arg2: memref<8x1xi32, #tpu.memory_space<vmem>>, %arg3: memref<16x384xf32, #tpu.memory_space<vmem>>, %arg4: memref<16x384xf32, #tpu.memory_space<vmem>>, %arg5: memref<1x384xf32, #tpu.memory_space<vmem>>, %arg6: memref<384x128xf32, #tpu.memory_space<vmem>>, %arg7: memref<1x128xf32, #tpu.memory_space<vmem>>, %arg8: memref<8x128xf32, #tpu.memory_space<vmem>>) attributes {dimension_semantics = [#tpu.dimension_semantics<parallel>], iteration_bounds = array<i64: 1>, scalar_prefetch = 0 : i64, scratch_operands = 0 : i64, tpu.core_type = #tpu.core_type<tc>, window_params = [{transform_indices = @transform_0, window_bounds = array<i64: 8, 1>}, {transform_indices = @transform_1, window_bounds = array<i64: 8, 1>}, {pipeline_mode = #tpu.pipeline_mode<synchronous>, transform_indices = @transform_2, window_bounds = array<i64: 16, 384>}, {pipeline_mode = #tpu.pipeline_mode<synchronous>, transform_indices = @transform_3, window_bounds = array<i64: 16, 384>}, {pipeline_mode = #tpu.pipeline_mode<synchronous>, transform_indices = @transform_4, window_bounds = array<i64: 1, 384>}, {pipeline_mode = #tpu.pipeline_mode<synchronous>, transform_indices = @transform_5, window_bounds = array<i64: 384, 128>}, {pipeline_mode = #tpu.pipeline_mode<synchronous>, transform_indices = @transform_6, window_bounds = array<i64: 1, 128>}, {transform_indices = @transform_7, window_bounds = array<i64: 8, 128>}]} {
    %0 = tpu.iota {dimensions = array<i32: 1>} : vector<8x16xi32>
    %c0 = arith.constant 0 : index
    %c0_0 = arith.constant 0 : index
    %1 = vector.load %arg1[%c0, %c0_0] : memref<8x1xi32, #tpu.memory_space<vmem>>, vector<8x1xi32>
    %2 = vector.broadcast %1 : vector<8x1xi32> to vector<8x16xi32>
    %3 = arith.cmpi eq, %2, %0 : vector<8x16xi32>
    %4 = arith.extui %3 : vector<8x16xi1> to vector<8x16xi32>
    %5 = arith.sitofp %4 : vector<8x16xi32> to vector<8x16xf32>
    %c0_1 = arith.constant 0 : index
    %c0_2 = arith.constant 0 : index
    %6 = vector.load %arg2[%c0_1, %c0_2] : memref<8x1xi32, #tpu.memory_space<vmem>>, vector<8x1xi32>
    %7 = vector.broadcast %6 : vector<8x1xi32> to vector<8x16xi32>
    %8 = arith.cmpi eq, %7, %0 : vector<8x16xi32>
    %9 = arith.extui %8 : vector<8x16xi1> to vector<8x16xi32>
    %10 = arith.sitofp %9 : vector<8x16xi32> to vector<8x16xf32>
    %c0_3 = arith.constant 0 : index
    %c0_4 = arith.constant 0 : index
    %11 = vector.load %arg3[%c0_3, %c0_4] : memref<16x384xf32, #tpu.memory_space<vmem>>, vector<16x384xf32>
    %cst = arith.constant dense<0.000000e+00> : vector<8x384xf32>
    %12 = tpu.matmul %5, %11, %cst {dimension_numbers = #tpu.dot_dimension_numbers<[1], [0], [0], [1], [0, 0, 1, 1], [], []>} : vector<8x16xf32>, vector<16x384xf32>, vector<8x384xf32> -> vector<8x384xf32>
    %c0_5 = arith.constant 0 : index
    %c0_6 = arith.constant 0 : index
    %13 = vector.load %arg4[%c0_5, %c0_6] : memref<16x384xf32, #tpu.memory_space<vmem>>, vector<16x384xf32>
    %cst_7 = arith.constant dense<0.000000e+00> : vector<8x384xf32>
    %14 = tpu.matmul %10, %13, %cst_7 {dimension_numbers = #tpu.dot_dimension_numbers<[1], [0], [0], [1], [0, 0, 1, 1], [], []>} : vector<8x16xf32>, vector<16x384xf32>, vector<8x384xf32> -> vector<8x384xf32>
    %15 = arith.addf %12, %14 : vector<8x384xf32>
    %c0_8 = arith.constant 0 : index
    %c0_9 = arith.constant 0 : index
    %16 = vector.load %arg5[%c0_8, %c0_9] : memref<1x384xf32, #tpu.memory_space<vmem>>, vector<1x384xf32>
    %17 = vector.broadcast %16 : vector<1x384xf32> to vector<8x384xf32>
    %18 = arith.addf %15, %17 : vector<8x384xf32>
    %cst_10 = arith.constant 0.000000e+00 : f32
    %19 = vector.broadcast %cst_10 : f32 to vector<8x384xf32>
    %20 = arith.maximumf %18, %19 : vector<8x384xf32>
    %c0_11 = arith.constant 0 : index
    %c0_12 = arith.constant 0 : index
    %21 = vector.load %arg6[%c0_11, %c0_12] : memref<384x128xf32, #tpu.memory_space<vmem>>, vector<384x128xf32>
    %cst_13 = arith.constant dense<0.000000e+00> : vector<8x128xf32>
    %22 = tpu.matmul %20, %21, %cst_13 {dimension_numbers = #tpu.dot_dimension_numbers<[1], [0], [0], [1], [0, 0, 1, 1], [], []>} : vector<8x384xf32>, vector<384x128xf32>, vector<8x128xf32> -> vector<8x128xf32>
    %c0_14 = arith.constant 0 : index
    %c0_15 = arith.constant 0 : index
    %23 = vector.load %arg7[%c0_14, %c0_15] : memref<1x128xf32, #tpu.memory_space<vmem>>, vector<1x128xf32>
    %24 = vector.broadcast %23 : vector<1x128xf32> to vector<8x128xf32>
    %25 = arith.addf %22, %24 : vector<8x128xf32>
    %c0_16 = arith.constant 0 : index
    %c0_17 = arith.constant 0 : index
    %26 = vector.load %arg8[%c0_16, %c0_17] : memref<8x128xf32, #tpu.memory_space<vmem>>, vector<8x128xf32>
    tpu.vector_store %arg8[%c0_16, %c0_17], %25 {strides = array<i32>} : memref<8x128xf32, #tpu.memory_space<vmem>>, vector<8x128xf32>,
    return
  }
  func.func @transform_0(%arg0: i32) -> (i32, i32) {
    %c0_i32 = arith.constant 0 : i32
    %c0_i32_0 = arith.constant 0 : i32
    return %arg0, %c0_i32 : i32, i32
  }
  func.func @transform_1(%arg0: i32) -> (i32, i32) {
    %c0_i32 = arith.constant 0 : i32
    %c0_i32_0 = arith.constant 0 : i32
    return %arg0, %c0_i32 : i32, i32
  }
  func.func @transform_2(%arg0: i32) -> (i32, i32) {
    %c0_i32 = arith.constant 0 : i32
    %c0_i32_0 = arith.constant 0 : i32
    %c0_i32_1 = arith.constant 0 : i32
    return %c0_i32, %c0_i32_0 : i32, i32
  }
  func.func @transform_3(%arg0: i32) -> (i32, i32) {
    %c0_i32 = arith.constant 0 : i32
    %c0_i32_0 = arith.constant 0 : i32
    %c0_i32_1 = arith.constant 0 : i32
    return %c0_i32, %c0_i32_0 : i32, i32
  }
  func.func @transform_4(%arg0: i32) -> (i32, i32) {
    %c0_i32 = arith.constant 0 : i32
    %c0_i32_0 = arith.constant 0 : i32
    %c0_i32_1 = arith.constant 0 : i32
    return %c0_i32, %c0_i32_0 : i32, i32
  }
  func.func @transform_5(%arg0: i32) -> (i32, i32) {
    %c0_i32 = arith.constant 0 : i32
    %c0_i32_0 = arith.constant 0 : i32
    %c0_i32_1 = arith.constant 0 : i32
    return %c0_i32, %c0_i32_0 : i32, i32
  }
  func.func @transform_6(%arg0: i32) -> (i32, i32) {
    %c0_i32 = arith.constant 0 : i32
    %c0_i32_0 = arith.constant 0 : i32
    %c0_i32_1 = arith.constant 0 : i32
    return %c0_i32, %c0_i32_0 : i32, i32
  }
  func.func @transform_7(%arg0: i32) -> (i32, i32) {
    %c0_i32 = arith.constant 0 : i32
    %c0_i32_0 = arith.constant 0 : i32
    return %arg0, %c0_i32 : i32, i32
  }
}

</mosaic_0001>

<llo_original>
// kernel: _lambda_.1
$region0: #{_lambda_.1}
  #allocation0 [shape = 'u32[]', space=smem, size = 0x4, offset = 0x4, fixed_abs, tag = 'smem constant byte address 0x4 - core index']
  #allocation1 [shape = 'u32[144,128]{1,0:T(1,128)}', space=vmem, size = 0x12000, scoped, tag = 'internal scratch']
  %s0 = inlined_call_operand.vmem [shape: s32[8,1], index: 0, kind: input, shape index: {}]
  %s1 = inlined_call_operand.vmem [shape: s32[8,1], index: 1, kind: input, shape index: {}]
  %s2 = inlined_call_operand.vmem [shape: f32[16,384], index: 2, kind: input, shape index: {}]
  %s3 = inlined_call_operand.vmem [shape: f32[16,384], index: 3, kind: input, shape index: {}]
  %s4 = inlined_call_operand.vmem [shape: f32[1,384], index: 4, kind: input, shape index: {}]
  %s5 = inlined_call_operand.vmem [shape: f32[384,128], index: 5, kind: input, shape index: {}]
  %s6 = inlined_call_operand.vmem [shape: f32[1,128], index: 6, kind: input, shape index: {}]
  %s7 = inlined_call_operand.vmem [shape: f32[8,128], index: 7, kind: output, shape index: {}]
  %s8 = sld [smem:[#allocation0]]
  $region38: #{_lambda_.1} parent=0
    _
  %s10 = ssub.s32 1, %s8
  %s11 = scalar_select 0, %s10, %s8
  // Predicated region
  $region2: #{_lambda_.1} parent=0 // pred_check
    _
  $region3: #{_lambda_.1} parent=0 // pred_check_branch
    %13 = sbr.rel (0) target = $region5
  $region4: #{_lambda_.1} parent=0 // pred_region
    _
  $region5: #{_lambda_.1} parent=0 // pred_fallthru
    _
  // Predicated region
  $region6: #{_lambda_.1} parent=0 // pred_check
    _
  $region7: #{_lambda_.1} parent=0 // pred_check_branch
    %15 = sbr.rel (0) target = $region9
  $region8: #{_lambda_.1} parent=0 // pred_region
    _
  $region9: #{_lambda_.1} parent=0 // pred_fallthru
    _
  // Predicated region
  $region10: #{_lambda_.1} parent=0 // pred_check
    _
  $region11: #{_lambda_.1} parent=0 // pred_check_branch
    %17 = sbr.rel (0) target = $region13
  $region12: #{_lambda_.1} parent=0 // pred_region
    _
  $region13: #{_lambda_.1} parent=0 // pred_fallthru
    _
  // Predicated region
  $region14: #{_lambda_.1} parent=0 // pred_check
    _
  $region15: #{_lambda_.1} parent=0 // pred_check_branch
    %19 = sbr.rel (0) target = $region17
  $region16: #{_lambda_.1} parent=0 // pred_region
    _
  $region17: #{_lambda_.1} parent=0 // pred_fallthru
    _
  // Predicated region
  $region18: #{_lambda_.1} parent=0 // pred_check
    _
  $region19: #{_lambda_.1} parent=0 // pred_check_branch
    %21 = sbr.rel (0) target = $region21
  $region20: #{_lambda_.1} parent=0 // pred_region
    _
  $region21: #{_lambda_.1} parent=0 // pred_fallthru
    _
  // Predicated region
  $region22: #{_lambda_.1} parent=0 // pred_check
    _
  $region23: #{_lambda_.1} parent=0 // pred_check_branch
    %23 = sbr.rel (0) target = $region25
  $region24: #{_lambda_.1} parent=0 // pred_region
    _
  $region25: #{_lambda_.1} parent=0 // pred_fallthru
    _
  // Predicated region
  $region26: #{_lambda_.1} parent=0 // pred_check
    _
  $region27: #{_lambda_.1} parent=0 // pred_check_branch
    %25 = sbr.rel (0) target = $region29
  $region28: #{_lambda_.1} parent=0 // pred_region
    _
  $region29: #{_lambda_.1} parent=0 // pred_fallthru
    _
  %v26 = vlaneseq
  %v27 = vand.u32 %v26, 127
  %v28 = vld [vmem:[%s0] sm:$0xff]
  %29 = vset.pattern.permute.xlu0 0
  %30 = vperm.xlu0 %29, %v28
  %v31 = vpop.permute.xlu0 %30
  %vm32 = vcmp.eq.s32.totalorder %v31, %v27
  %v33 = vsel %vm32, 1, 0
  %v34 = vcvt.s32.f32 %v33
  %v35 = vld [vmem:[%s1] sm:$0xff]
  %36 = vset.pattern.permute.xlu0 0
  %37 = vperm.xlu0 %36, %v35
  %v38 = vpop.permute.xlu0 %37
  %vm39 = vcmp.eq.s32.totalorder %v38, %v27
  %v40 = vsel %vm39, 1, 0
  %v41 = vcvt.s32.f32 %v40
  %v42 = vld [vmem:[%s2] sm:$0xff]
  %v43 = vld [vmem:[%s2 + $0x8] sm:$0xff]
  %v44 = vld [vmem:[%s2 + $0x10] sm:$0xff]
  %v45 = vld [vmem:[%s2 + $0x18] sm:$0xff]
  %v46 = vld [vmem:[%s2 + $0x20] sm:$0xff]
  %v47 = vld [vmem:[%s2 + $0x28] sm:$0xff]
  %v48 = vld [vmem:[%s3] sm:$0xff]
  %v49 = vld [vmem:[%s3 + $0x8] sm:$0xff]
  %v50 = vld [vmem:[%s3 + $0x10] sm:$0xff]
  %v51 = vld [vmem:[%s3 + $0x18] sm:$0xff]
  %v52 = vld [vmem:[%s3 + $0x20] sm:$0xff]
  %v53 = vld [vmem:[%s3 + $0x28] sm:$0xff]
  %vm54 = vcmask 130048
  %v56 = vsel %vm54, %v41, 0
  %58 = vmatprep.subr.mxu0 %v49
  %59 = vmatpush1.msra.mxu0 %v48
  %60 = vmatprep.subr.mxu0 %v52
  %61 = vmatpush1.msra.mxu0 %v51
  %62 = vmatprep.subr.mxu0 0.0
  %63 = vmatpush1.msra.mxu0 0.0
  %64 = vmatprep.subr.mxu0 0.0
  %65 = vmatpush1.msra.mxu0 0.0
  %66 = vmatprep.subr.mxu0 0.0
  %67 = vmatpush1.msra.mxu0 0.0
  %68 = vmatprep.subr.mxu0 0.0
  %69 = vmatpush1.msra.mxu0 0.0
  %70 = vmatprep.subr.mxu0 0.0
  %71 = vmatpush1.msra.mxu0 0.0
  %72 = vmatprep.subr.mxu0 0.0
  %73 = vmatpush1.msra.mxu0 0.0
  %74 = vmatprep.subr.mxu0 0.0
  %75 = vmatpush1.msra.mxu0 0.0
  %76 = vmatprep.subr.mxu0 0.0
  %77 = vmatpush1.msra.mxu0 0.0
  %78 = vmatprep.subr.mxu0 0.0
  %79 = vmatpush1.msra.mxu0 0.0
  %80 = vmatprep.subr.mxu0 0.0
  %81 = vmatpush1.msra.mxu0 0.0
  %82 = vmatprep.subr.mxu0 0.0
  %83 = vmatpush1.msra.mxu0 0.0
  %84 = vmatprep.subr.mxu0 0.0
  %85 = vmatpush1.msra.mxu0 0.0
  %86 = vmatprep.subr.mxu0 0.0
  %87 = vmatpush1.msra.mxu0 0.0
  %88 = vmatprep.subr.mxu0 0.0
  %89 = vmatpush1.msra.mxu0 0.0
  %90 = vmatprep.subr.mxu0 0.0
  %91 = vmatpush1.msra.mxu0 0.0
  %92 = vmatprep.subr.mxu0 0.0
  %93 = vmatpush1.msra.mxu0 0.0
  %94 = vmatprep.subr.mxu0 0.0
  %95 = vmatpush1.msra.mxu0 0.0
  %96 = vmatprep.subr.mxu0 0.0
  %97 = vmatpush1.msra.mxu0 0.0
  %98 = vmatprep.subr.mxu0 0.0
  %99 = vmatpush1.msra.mxu0 0.0
  %100 = vmatprep.subr.mxu0 0.0
  %101 = vmatpush1.msra.mxu0 0.0
  %102 = vmatprep.subr.mxu0 0.0
  %103 = vmatpush1.msra.mxu0 0.0
  %104 = vmatprep.subr.mxu0 0.0
  %105 = vmatpush1.msra.mxu0 0.0
  %106 = vmatprep.subr.mxu0 0.0
  %107 = vmatpush1.msra.mxu0 0.0
  %108 = vmatprep.subr.mxu0 0.0
  %109 = vmatpush1.msra.mxu0 0.0
  %110 = vmatprep.subr.mxu0 0.0
  %111 = vmatpush1.msra.mxu0 0.0
  %112 = vmatprep.subr.mxu0 0.0
  %113 = vmatpush1.msra.mxu0 0.0
  %114 = vmatprep.subr.mxu0 0.0
  %115 = vmatpush1.msra.mxu0 0.0
  %116 = vmatprep.subr.mxu0 0.0
  %117 = vmatpush1.msra.mxu0 0.0
  %118 = vmatprep.subr.mxu0 0.0
  %119 = vmatpush1.msra.mxu0 0.0
  %120 = vmatprep.subr.mxu0 0.0
  %121 = vmatpush1.msra.mxu0 0.0
  %122 = vmatprep.mubr.f32.mxu0 0.0
  %123 = vmatmul.mubr.f32.gmra.mrb[0].mxu0 %v56
  %v124 = vpop.f32.mrb[0].mxu0
  %v125 = vadd.f32 0.0, %v124
  %v126 = vpop.f32.mrb[0].mxu0
  %v127 = vadd.f32 0.0, %v126
  %128 = vdwg.mxu0
  %129 = vmatprep.subr.mxu0 0.0
  %130 = vmatpush1.msra.mxu0 %v50
  %131 = vmatprep.subr.mxu0 0.0
  %132 = vmatpush1.msra.mxu0 %v53
  %133 = vmatprep.subr.mxu0 0.0
  %134 = vmatpush1.msra.mxu0 0.0
  %135 = vmatprep.subr.mxu0 0.0
  %136 = vmatpush1.msra.mxu0 0.0
  %137 = vmatprep.subr.mxu0 0.0
  %138 = vmatpush1.msra.mxu0 0.0
  %139 = vmatprep.subr.mxu0 0.0
  %140 = vmatpush1.msra.mxu0 0.0
  %141 = vmatprep.subr.mxu0 0.0
  %142 = vmatpush1.msra.mxu0 0.0
  %143 = vmatprep.subr.mxu0 0.0
  %144 = vmatpush1.msra.mxu0 0.0
  %145 = vmatprep.subr.mxu0 0.0
  %146 = vmatpush1.msra.mxu0 0.0
  %147 = vmatprep.subr.mxu0 0.0
  %148 = vmatpush1.msra.mxu0 0.0
  %149 = vmatprep.subr.mxu0 0.0
  %150 = vmatpush1.msra.mxu0 0.0
  %151 = vmatprep.subr.mxu0 0.0
  %152 = vmatpush1.msra.mxu0 0.0
  %153 = vmatprep.subr.mxu0 0.0
  %154 = vmatpush1.msra.mxu0 0.0
  %155 = vmatprep.subr.mxu0 0.0
  %156 = vmatpush1.msra.mxu0 0.0
  %157 = vmatprep.subr.mxu0 0.0
  %158 = vmatpush1.msra.mxu0 0.0
  %159 = vmatprep.subr.mxu0 0.0
  %160 = vmatpush1.msra.mxu0 0.0
  %161 = vmatprep.subr.mxu0 0.0
  %162 = vmatpush1.msra.mxu0 0.0
  %163 = vmatprep.subr.mxu0 0.0
  %164 = vmatpush1.msra.mxu0 0.0
  %165 = vmatprep.subr.mxu0 0.0
  %166 = vmatpush1.msra.mxu0 0.0
  %167 = vmatprep.subr.mxu0 0.0
  %168 = vmatpush1.msra.mxu0 0.0
  %169 = vmatprep.subr.mxu0 0.0
  %170 = vmatpush1.msra.mxu0 0.0
  %171 = vmatprep.subr.mxu0 0.0
  %172 = vmatpush1.msra.mxu0 0.0
  %173 = vmatprep.subr.mxu0 0.0
  %174 = vmatpush1.msra.mxu0 0.0
  %175 = vmatprep.subr.mxu0 0.0
  %176 = vmatpush1.msra.mxu0 0.0
  %177 = vmatprep.subr.mxu0 0.0
  %178 = vmatpush1.msra.mxu0 0.0
  %179 = vmatprep.subr.mxu0 0.0
  %180 = vmatpush1.msra.mxu0 0.0
  %181 = vmatprep.subr.mxu0 0.0
  %182 = vmatpush1.msra.mxu0 0.0
  %183 = vmatprep.subr.mxu0 0.0
  %184 = vmatpush1.msra.mxu0 0.0
  %185 = vmatprep.subr.mxu0 0.0
  %186 = vmatpush1.msra.mxu0 0.0
  %187 = vmatprep.subr.mxu0 0.0
  %188 = vmatpush1.msra.mxu0 0.0
  %189 = vmatprep.subr.mxu0 0.0
  %190 = vmatpush1.msra.mxu0 0.0
  %191 = vmatprep.subr.mxu0 0.0
  %192 = vmatpush1.msra.mxu0 0.0
  %193 = vmatprep.mubr.f32.mxu0 0.0
  %194 = vmatmul.mubr.f32.gmra.mrb[0].mxu0 %v56
  %v195 = vpop.f32.mrb[0].mxu0
  %v196 = vadd.f32 0.0, %v195
  %v197 = vpop.f32.mrb[0].mxu0
  %198 = vdwg.mxu0
  %v200 = vsel %vm54, %v34, 0
  %202 = vmatprep.subr.mxu0 %v43
  %203 = vmatpush1.msra.mxu0 %v42
  %204 = vmatprep.subr.mxu0 %v46
  %205 = vmatpush1.msra.mxu0 %v45
  %206 = vmatprep.subr.mxu0 0.0
  %207 = vmatpush1.msra.mxu0 0.0
  %208 = vmatprep.subr.mxu0 0.0
  %209 = vmatpush1.msra.mxu0 0.0
  %210 = vmatprep.subr.mxu0 0.0
  %211 = vmatpush1.msra.mxu0 0.0
  %212 = vmatprep.subr.mxu0 0.0
  %213 = vmatpush1.msra.mxu0 0.0
  %214 = vmatprep.subr.mxu0 0.0
  %215 = vmatpush1.msra.mxu0 0.0
  %216 = vmatprep.subr.mxu0 0.0
  %217 = vmatpush1.msra.mxu0 0.0
  %218 = vmatprep.subr.mxu0 0.0
  %219 = vmatpush1.msra.mxu0 0.0
  %220 = vmatprep.subr.mxu0 0.0
  %221 = vmatpush1.msra.mxu0 0.0
  %222 = vmatprep.subr.mxu0 0.0
  %223 = vmatpush1.msra.mxu0 0.0
  %224 = vmatprep.subr.mxu0 0.0
  %225 = vmatpush1.msra.mxu0 0.0
  %226 = vmatprep.subr.mxu0 0.0
  %227 = vmatpush1.msra.mxu0 0.0
  %228 = vmatprep.subr.mxu0 0.0
  %229 = vmatpush1.msra.mxu0 0.0
  %230 = vmatprep.subr.mxu0 0.0
  %231 = vmatpush1.msra.mxu0 0.0
  %232 = vmatprep.subr.mxu0 0.0
  %233 = vmatpush1.msra.mxu0 0.0
  %234 = vmatprep.subr.mxu0 0.0
  %235 = vmatpush1.msra.mxu0 0.0
  %236 = vmatprep.subr.mxu0 0.0
  %237 = vmatpush1.msra.mxu0 0.0
  %238 = vmatprep.subr.mxu0 0.0
  %239 = vmatpush1.msra.mxu0 0.0
  %240 = vmatprep.subr.mxu0 0.0
  %241 = vmatpush1.msra.mxu0 0.0
  %242 = vmatprep.subr.mxu0 0.0
  %243 = vmatpush1.msra.mxu0 0.0
  %244 = vmatprep.subr.mxu0 0.0
  %245 = vmatpush1.msra.mxu0 0.0
  %246 = vmatprep.subr.mxu0 0.0
  %247 = vmatpush1.msra.mxu0 0.0
  %248 = vmatprep.subr.mxu0 0.0
  %249 = vmatpush1.msra.mxu0 0.0
  %250 = vmatprep.subr.mxu0 0.0
  %251 = vmatpush1.msra.mxu0 0.0
  %252 = vmatprep.subr.mxu0 0.0
  %253 = vmatpush1.msra.mxu0 0.0
  %254 = vmatprep.subr.mxu0 0.0
  %255 = vmatpush1.msra.mxu0 0.0
  %256 = vmatprep.subr.mxu0 0.0
  %257 = vmatpush1.msra.mxu0 0.0
  %258 = vmatprep.subr.mxu0 0.0
  %259 = vmatpush1.msra.mxu0 0.0
  %260 = vmatprep.subr.mxu0 0.0
  %261 = vmatpush1.msra.mxu0 0.0
  %262 = vmatprep.subr.mxu0 0.0
  %263 = vmatpush1.msra.mxu0 0.0
  %264 = vmatprep.subr.mxu0 0.0
  %265 = vmatpush1.msra.mxu0 0.0
  %266 = vmatprep.mubr.f32.mxu0 0.0
  %267 = vmatmul.mubr.f32.gmra.mrb[0].mxu0 %v200
  %v268 = vpop.f32.mrb[0].mxu0
  %v269 = vadd.f32 %v125, %v268
  %v270 = vpop.f32.mrb[0].mxu0
  %v271 = vadd.f32 %v127, %v270
  %272 = vdwg.mxu0
  %273 = vmatprep.subr.mxu0 0.0
  %274 = vmatpush1.msra.mxu0 %v44
  %275 = vmatprep.subr.mxu0 0.0
  %276 = vmatpush1.msra.mxu0 %v47
  %277 = vmatprep.subr.mxu0 0.0
  %278 = vmatpush1.msra.mxu0 0.0
  %279 = vmatprep.subr.mxu0 0.0
  %280 = vmatpush1.msra.mxu0 0.0
  %281 = vmatprep.subr.mxu0 0.0
  %282 = vmatpush1.msra.mxu0 0.0
  %283 = vmatprep.subr.mxu0 0.0
  %284 = vmatpush1.msra.mxu0 0.0
  %285 = vmatprep.subr.mxu0 0.0
  %286 = vmatpush1.msra.mxu0 0.0
  %287 = vmatprep.subr.mxu0 0.0
  %288 = vmatpush1.msra.mxu0 0.0
  %289 = vmatprep.subr.mxu0 0.0
  %290 = vmatpush1.msra.mxu0 0.0
  %291 = vmatprep.subr.mxu0 0.0
  %292 = vmatpush1.msra.mxu0 0.0
  %293 = vmatprep.subr.mxu0 0.0
  %294 = vmatpush1.msra.mxu0 0.0
  %295 = vmatprep.subr.mxu0 0.0
  %296 = vmatpush1.msra.mxu0 0.0
  %297 = vmatprep.subr.mxu0 0.0
  %298 = vmatpush1.msra.mxu0 0.0
  %299 = vmatprep.subr.mxu0 0.0
  %300 = vmatpush1.msra.mxu0 0.0
  %301 = vmatprep.subr.mxu0 0.0
  %302 = vmatpush1.msra.mxu0 0.0
  %303 = vmatprep.subr.mxu0 0.0
  %304 = vmatpush1.msra.mxu0 0.0
  %305 = vmatprep.subr.mxu0 0.0
  %306 = vmatpush1.msra.mxu0 0.0
  %307 = vmatprep.subr.mxu0 0.0
  %308 = vmatpush1.msra.mxu0 0.0
  %309 = vmatprep.subr.mxu0 0.0
  %310 = vmatpush1.msra.mxu0 0.0
  %311 = vmatprep.subr.mxu0 0.0
  %312 = vmatpush1.msra.mxu0 0.0
  %313 = vmatprep.subr.mxu0 0.0
  %314 = vmatpush1.msra.mxu0 0.0
  %315 = vmatprep.subr.mxu0 0.0
  %316 = vmatpush1.msra.mxu0 0.0
  %317 = vmatprep.subr.mxu0 0.0
  %318 = vmatpush1.msra.mxu0 0.0
  %319 = vmatprep.subr.mxu0 0.0
  %320 = vmatpush1.msra.mxu0 0.0
  %321 = vmatprep.subr.mxu0 0.0
  %322 = vmatpush1.msra.mxu0 0.0
  %323 = vmatprep.subr.mxu0 0.0
  %324 = vmatpush1.msra.mxu0 0.0
  %325 = vmatprep.subr.mxu0 0.0
  %326 = vmatpush1.msra.mxu0 0.0
  %327 = vmatprep.subr.mxu0 0.0
  %328 = vmatpush1.msra.mxu0 0.0
  %329 = vmatprep.subr.mxu0 0.0
  %330 = vmatpush1.msra.mxu0 0.0
  %331 = vmatprep.subr.mxu0 0.0
  %332 = vmatpush1.msra.mxu0 0.0
  %333 = vmatprep.subr.mxu0 0.0
  %334 = vmatpush1.msra.mxu0 0.0
  %335 = vmatprep.subr.mxu0 0.0
  %336 = vmatpush1.msra.mxu0 0.0
  %337 = vmatprep.mubr.f32.mxu0 0.0
  %338 = vmatmul.mubr.f32.gmra.mrb[0].mxu0 %v200
  %v339 = vpop.f32.mrb[0].mxu0
  %v340 = vadd.f32 %v196, %v339
  %v341 = vpop.f32.mrb[0].mxu0
  %342 = vdwg.mxu0
  %v343 = vld [vmem:[%s4] sm:$0x7]
  %v345 = vlaneseq
  %v346 = vshrl.u32 %v345, 7
  %v347 = vsub.s32 0, %v346
  %v348 = vrot.slane %v343, %v347
  %v349 = vlaneseq
  %v350 = vshrl.u32 %v349, 7
  %v351 = vsub.s32 1, %v350
  %v352 = vrot.slane %v343, %v351
  %v353 = vlaneseq
  %v354 = vshrl.u32 %v353, 7
  %v355 = vsub.s32 2, %v354
  %v356 = vrot.slane %v343, %v355
  %v360 = vadd.f32 %v269, %v348
  %v361 = vadd.f32 %v271, %v352
  %v362 = vadd.f32 %v340, %v356
  %v363 = vmax.f32 %v360, 0.0
  %v364 = vmax.f32 %v361, 0.0
  %v365 = vmax.f32 %v362, 0.0
  %v366 = vld [vmem:[%s5] sm:$0xff]
  %v367 = vld [vmem:[%s5 + $0x8] sm:$0xff]
  %v368 = vld [vmem:[%s5 + $0x10] sm:$0xff]
  %v369 = vld [vmem:[%s5 + $0x18] sm:$0xff]
  %v370 = vld [vmem:[%s5 + $0x20] sm:$0xff]
  %v371 = vld [vmem:[%s5 + $0x28] sm:$0xff]
  %v372 = vld [vmem:[%s5 + $0x30] sm:$0xff]
  %v373 = vld [vmem:[%s5 + $0x38] sm:$0xff]
  %v374 = vld [vmem:[%s5 + $0x40] sm:$0xff]
  %v375 = vld [vmem:[%s5 + $0x48] sm:$0xff]
  %v376 = vld [vmem:[%s5 + $0x50] sm:$0xff]
  %v377 = vld [vmem:[%s5 + $0x58] sm:$0xff]
  %v378 = vld [vmem:[%s5 + $0x60] sm:$0xff]
  %v379 = vld [vmem:[%s5 + $0x68] sm:$0xff]
  %v380 = vld [vmem:[%s5 + $0x70] sm:$0xff]
  %v381 = vld [vmem:[%s5 + $0x78] sm:$0xff]
  %v382 = vld [vmem:[%s5 + $0x80] sm:$0xff]
  %v383 = vld [vmem:[%s5 + $0x88] sm:$0xff]
  %v384 = vld [vmem:[%s5 + $0x90] sm:$0xff]
  %v385 = vld [vmem:[%s5 + $0x98] sm:$0xff]
  %v386 = vld [vmem:[%s5 + $0xa0] sm:$0xff]
  %v387 = vld [vmem:[%s5 + $0xa8] sm:$0xff]
  %v388 = vld [vmem:[%s5 + $0xb0] sm:$0xff]
  %v389 = vld [vmem:[%s5 + $0xb8] sm:$0xff]
  %v390 = vld [vmem:[%s5 + $0xc0] sm:$0xff]
  %v391 = vld [vmem:[%s5 + $0xc8] sm:$0xff]
  %v392 = vld [vmem:[%s5 + $0xd0] sm:$0xff]
  %v393 = vld [vmem:[%s5 + $0xd8] sm:$0xff]
  %v394 = vld [vmem:[%s5 + $0xe0] sm:$0xff]
  %v395 = vld [vmem:[%s5 + $0xe8] sm:$0xff]
  %v396 = vld [vmem:[%s5 + $0xf0] sm:$0xff]
  %v397 = vld [vmem:[%s5 + $0xf8] sm:$0xff]
  %v398 = vld [vmem:[%s5 + $0x100] sm:$0xff]
  %v399 = vld [vmem:[%s5 + $0x108] sm:$0xff]
  %v400 = vld [vmem:[%s5 + $0x110] sm:$0xff]
  %v401 = vld [vmem:[%s5 + $0x118] sm:$0xff]
  %v402 = vld [vmem:[%s5 + $0x120] sm:$0xff]
  %v403 = vld [vmem:[%s5 + $0x128] sm:$0xff]
  %v404 = vld [vmem:[%s5 + $0x130] sm:$0xff]
  %v405 = vld [vmem:[%s5 + $0x138] sm:$0xff]
  %v406 = vld [vmem:[%s5 + $0x140] sm:$0xff]
  %v407 = vld [vmem:[%s5 + $0x148] sm:$0xff]
  %v408 = vld [vmem:[%s5 + $0x150] sm:$0xff]
  %v409 = vld [vmem:[%s5 + $0x158] sm:$0xff]
  %v410 = vld [vmem:[%s5 + $0x160] sm:$0xff]
  %v411 = vld [vmem:[%s5 + $0x168] sm:$0xff]
  %v412 = vld [vmem:[%s5 + $0x170] sm:$0xff]
  %v413 = vld [vmem:[%s5 + $0x178] sm:$0xff]
  %v414 = vld [vmem:[%s6] sm:$0x1]
  %v416 = vlaneseq
  %v417 = vshrl.u32 %v416, 7
  %v418 = vsub.s32 0, %v417
  %v419 = vrot.slane %v414, %v418
  %421 = vmatprep.subr.mxu0 0.0
  %422 = vmatpush1.msra.mxu0 %v366
  %423 = vmatprep.subr.mxu0 0.0
  %424 = vmatpush1.msra.mxu0 %v367
  %425 = vmatprep.subr.mxu0 0.0
  %426 = vmatpush1.msra.mxu0 %v368
  %427 = vmatprep.subr.mxu0 0.0
  %428 = vmatpush1.msra.mxu0 %v369
  %429 = vmatprep.subr.mxu0 0.0
  %430 = vmatpush1.msra.mxu0 %v370
  %431 = vmatprep.subr.mxu0 0.0
  %432 = vmatpush1.msra.mxu0 %v371
  %433 = vmatprep.subr.mxu0 0.0
  %434 = vmatpush1.msra.mxu0 %v372
  %435 = vmatprep.subr.mxu0 0.0
  %436 = vmatpush1.msra.mxu0 %v373
  %437 = vmatprep.subr.mxu0 0.0
  %438 = vmatpush1.msra.mxu0 %v374
  %439 = vmatprep.subr.mxu0 0.0
  %440 = vmatpush1.msra.mxu0 %v375
  %441 = vmatprep.subr.mxu0 0.0
  %442 = vmatpush1.msra.mxu0 %v376
  %443 = vmatprep.subr.mxu0 0.0
  %444 = vmatpush1.msra.mxu0 %v377
  %445 = vmatprep.subr.mxu0 0.0
  %446 = vmatpush1.msra.mxu0 %v378
  %447 = vmatprep.subr.mxu0 0.0
  %448 = vmatpush1.msra.mxu0 %v379
  %449 = vmatprep.subr.mxu0 0.0
  %450 = vmatpush1.msra.mxu0 %v380
  %451 = vmatprep.subr.mxu0 0.0
  %452 = vmatpush1.msra.mxu0 %v381
  %453 = vmatprep.subr.mxu0 0.0
  %454 = vmatpush1.msra.mxu0 %v382
  %455 = vmatprep.subr.mxu0 0.0
  %456 = vmatpush1.msra.mxu0 %v383
  %457 = vmatprep.subr.mxu0 0.0
  %458 = vmatpush1.msra.mxu0 %v384
  %459 = vmatprep.subr.mxu0 0.0
  %460 = vmatpush1.msra.mxu0 %v385
  %461 = vmatprep.subr.mxu0 0.0
  %462 = vmatpush1.msra.mxu0 %v386
  %463 = vmatprep.subr.mxu0 0.0
  %464 = vmatpush1.msra.mxu0 %v387
  %465 = vmatprep.subr.mxu0 0.0
  %466 = vmatpush1.msra.mxu0 %v388
  %467 = vmatprep.subr.mxu0 0.0
  %468 = vmatpush1.msra.mxu0 %v389
  %469 = vmatprep.subr.mxu0 0.0
  %470 = vmatpush1.msra.mxu0 %v390
  %471 = vmatprep.subr.mxu0 0.0
  %472 = vmatpush1.msra.mxu0 %v391
  %473 = vmatprep.subr.mxu0 0.0
  %474 = vmatpush1.msra.mxu0 %v392
  %475 = vmatprep.subr.mxu0 0.0
  %476 = vmatpush1.msra.mxu0 %v393
  %477 = vmatprep.subr.mxu0 0.0
  %478 = vmatpush1.msra.mxu0 %v394
  %479 = vmatprep.subr.mxu0 0.0
  %480 = vmatpush1.msra.mxu0 %v395
  %481 = vmatprep.subr.mxu0 0.0
  %482 = vmatpush1.msra.mxu0 %v396
  %483 = vmatprep.subr.mxu0 0.0
  %484 = vmatpush1.msra.mxu0 %v397
  %485 = vmatprep.mubr.f32.mxu0 %v364
  %486 = vmatmul.mubr.f32.gmra.mrb[0].mxu0 %v363
  %v487 = vpop.f32.mrb[0].mxu0
  %v488 = vadd.f32 %v419, %v487
  %v489 = vpop.f32.mrb[0].mxu0
  %490 = vdwg.mxu0
  %491 = vmatprep.subr.mxu0 0.0
  %492 = vmatpush1.msra.mxu0 %v398
  %493 = vmatprep.subr.mxu0 0.0
  %494 = vmatpush1.msra.mxu0 %v399
  %495 = vmatprep.subr.mxu0 0.0
  %496 = vmatpush1.msra.mxu0 %v400
  %497 = vmatprep.subr.mxu0 0.0
  %498 = vmatpush1.msra.mxu0 %v401
  %499 = vmatprep.subr.mxu0 0.0
  %500 = vmatpush1.msra.mxu0 %v402
  %501 = vmatprep.subr.mxu0 0.0
  %502 = vmatpush1.msra.mxu0 %v403
  %503 = vmatprep.subr.mxu0 0.0
  %504 = vmatpush1.msra.mxu0 %v404
  %505 = vmatprep.subr.mxu0 0.0
  %506 = vmatpush1.msra.mxu0 %v405
  %507 = vmatprep.subr.mxu0 0.0
  %508 = vmatpush1.msra.mxu0 %v406
  %509 = vmatprep.subr.mxu0 0.0
  %510 = vmatpush1.msra.mxu0 %v407
  %511 = vmatprep.subr.mxu0 0.0
  %512 = vmatpush1.msra.mxu0 %v408
  %513 = vmatprep.subr.mxu0 0.0
  %514 = vmatpush1.msra.mxu0 %v409
  %515 = vmatprep.subr.mxu0 0.0
  %516 = vmatpush1.msra.mxu0 %v410
  %517 = vmatprep.subr.mxu0 0.0
  %518 = vmatpush1.msra.mxu0 %v411
  %519 = vmatprep.subr.mxu0 0.0
  %520 = vmatpush1.msra.mxu0 %v412
  %521 = vmatprep.subr.mxu0 0.0
  %522 = vmatpush1.msra.mxu0 %v413
  %523 = vmatprep.subr.mxu0 0.0
  %524 = vmatpush1.msra.mxu0 0.0
  %525 = vmatprep.subr.mxu0 0.0
  %526 = vmatpush1.msra.mxu0 0.0
  %527 = vmatprep.subr.mxu0 0.0
  %528 = vmatpush1.msra.mxu0 0.0
  %529 = vmatprep.subr.mxu0 0.0
  %530 = vmatpush1.msra.mxu0 0.0
  %531 = vmatprep.subr.mxu0 0.0
  %532 = vmatpush1.msra.mxu0 0.0
  %533 = vmatprep.subr.mxu0 0.0
  %534 = vmatpush1.msra.mxu0 0.0
  %535 = vmatprep.subr.mxu0 0.0
  %536 = vmatpush1.msra.mxu0 0.0
  %537 = vmatprep.subr.mxu0 0.0
  %538 = vmatpush1.msra.mxu0 0.0
  %539 = vmatprep.subr.mxu0 0.0
  %540 = vmatpush1.msra.mxu0 0.0
  %541 = vmatprep.subr.mxu0 0.0
  %542 = vmatpush1.msra.mxu0 0.0
  %543 = vmatprep.subr.mxu0 0.0
  %544 = vmatpush1.msra.mxu0 0.0
  %545 = vmatprep.subr.mxu0 0.0
  %546 = vmatpush1.msra.mxu0 0.0
  %547 = vmatprep.subr.mxu0 0.0
  %548 = vmatpush1.msra.mxu0 0.0
  %549 = vmatprep.subr.mxu0 0.0
  %550 = vmatpush1.msra.mxu0 0.0
  %551 = vmatprep.subr.mxu0 0.0
  %552 = vmatpush1.msra.mxu0 0.0
  %553 = vmatprep.subr.mxu0 0.0
  %554 = vmatpush1.msra.mxu0 0.0
  %555 = vmatprep.mubr.f32.mxu0 0.0
  %556 = vmatmul.mubr.f32.gmra.mrb[0].mxu0 %v365
  %v557 = vpop.f32.mrb[0].mxu0
  %v558 = vadd.f32 %v488, %v557
  %v559 = vpop.f32.mrb[0].mxu0
  %560 = vdwg.mxu0
  %561 = vst [vmem:[%s7] sm:$0xff] %v558
  // Predicated region
  $region30: #{_lambda_.1} parent=0 // pred_check
    _
  $region31: #{_lambda_.1} parent=0 // pred_check_branch
    %563 = sbr.rel (0) target = $region33
  $region32: #{_lambda_.1} parent=0 // pred_region
    _
  $region33: #{_lambda_.1} parent=0 // pred_fallthru
    _
  // Predicated region
  $region34: #{_lambda_.1} parent=0 // pred_check
    _
  $region35: #{_lambda_.1} parent=0 // pred_check_branch
    %565 = sbr.rel (0) target = $region37
  $region36: #{_lambda_.1} parent=0 // pred_region
    _
  $region37: #{_lambda_.1} parent=0 // pred_fallthru
    _

</llo_original>
